<compile_context>
chip_gen: v6e
topology: v6e:2x2x1
jax: 0.10.0
libtpu: 0.0.40
codegen_flags: <defaults>
</compile_context>

<pallas_src>
import functools

import jax
import jax.numpy as jnp
from jax import lax
from jax.experimental import pallas as pl
from jax.experimental.pallas import tpu as pltpu

MARGIN = 0.6
REG_CONSTANT = 1e-9   # preserve term is identically 0 (x aliases x_hat); kept for documentation
TOPK = 3


def _attract_preserve_kernel(x_ref, v_ref, out_ref, vbar_ref, *, total_v, tile_v):
    k = pl.program_id(0)

    @pl.when(k == 0)
    def _init():
        vbar_ref[...] = jnp.zeros_like(vbar_ref)

    # ---- streaming phase: accumulate the row-sum of the L2-normalized vocab tile ----
    v = v_ref[...].astype(jnp.float32)                               # (tile_v, D)
    inv_norm = lax.rsqrt(jnp.sum(v * v, axis=1, keepdims=True))      # EUP rsqrt, per row
    vn = v * inv_norm
    if total_v % tile_v != 0:
        # mask out-of-range rows of the (possibly partial) last tile
        row = k * tile_v + lax.broadcasted_iota(jnp.int32, (tile_v, 1), 0)
        vn = jnp.where(row < total_v, vn, 0.0)
    vbar_ref[...] += jnp.sum(vn, axis=0, keepdims=True)              # (1, D)

    # ---- epilogue: runs once, on the last vocab tile ----
    @pl.when(k == pl.num_programs(0) - 1)
    def _finalize():
        x = x_ref[...].astype(jnp.float32)                           # (N, D)
        xn = x * lax.rsqrt(jnp.sum(x * x, axis=1, keepdims=True))

        # sim_i = 1 - xn_i . vbar ; contract D axes directly, keep lane-major (1, N)
        sim = 1.0 - lax.dot_general(
            vbar_ref[...], xn,
            dimension_numbers=(((1,), (1,)), ((), ())),
            preferred_element_type=jnp.float32)                      # (1, N)

        n_cols = sim.shape[1]
        ids = lax.broadcasted_iota(jnp.int32, sim.shape, 1)          # (1, N)

        # 3 smallest sim values (== sorted_sim[:3]); duplicates handled by index masking
        neg_vals = []
        mask = jnp.ones(sim.shape, dtype=jnp.bool_)
        for _ in range(TOPK):
            vals = jnp.where(mask, sim, jnp.inf)
            m = jnp.min(vals, keepdims=True)                         # (1, 1)
            first = jnp.min(jnp.where(vals == m, ids, n_cols), keepdims=True)
            mask = mask & (ids != first)
            neg_vals.append(m)

        # 3 largest sim values (== sorted_sim[-3:])
        pos_vals = []
        mask = jnp.ones(sim.shape, dtype=jnp.bool_)
        for _ in range(TOPK):
            vals = jnp.where(mask, sim, -jnp.inf)
            m = jnp.max(vals, keepdims=True)                         # (1, 1)
            first = jnp.min(jnp.where(vals == m, ids, n_cols), keepdims=True)
            mask = mask & (ids != first)
            pos_vals.append(m)

        att = jnp.zeros((1, 1), jnp.float32)
        for n in neg_vals:
            for p in pos_vals:
                att = att + jnp.maximum(MARGIN + n - p, 0.0)

        # preserve term: torch code normalizes x_hat in-place, so x IS x_hat and
        # ||x_hat_norm - x_norm|| == 0 identically -> REG_CONSTANT * 0 folded away.
        out_ref[...] = att


def attract_preserve(x_hat, vocab, *, tile_v=512):
    """Pallas TPU implementation of AttractPreserve.forward. Returns a scalar float32."""
    N, D = x_hat.shape
    V, Dv = vocab.shape
    assert D == Dv, (x_hat.shape, vocab.shape)

    if tile_v >= V:
        tv = V                                    # single tile == full array (always legal)
    else:
        tv = max(8, (tile_v // 8) * 8)            # sublane-aligned tile height

    grid = (pl.cdiv(V, tv),)
    kernel = functools.partial(_attract_preserve_kernel, total_v=V, tile_v=tv)

    out = pl.pallas_call(
        kernel,
        out_shape=jax.ShapeDtypeStruct((1, 1), jnp.float32),
        grid_spec=pltpu.PrefetchScalarGridSpec(
            num_scalar_prefetch=0,
            grid=grid,
            in_specs=[
                pl.BlockSpec((N, D), lambda k: (0, 0)),    # x_hat: small, stays resident
                pl.BlockSpec((tv, D), lambda k: (k, 0)),   # vocab: streamed / double-buffered
            ],
            out_specs=pl.BlockSpec((1, 1), lambda k: (0, 0)),
            scratch_shapes=[pltpu.VMEM((1, D), jnp.float32)],   # vbar accumulator
        ),
        compiler_params=pltpu.CompilerParams(
            dimension_semantics=("arbitrary",),   # reduction over vocab tiles
        ),
    )(x_hat, vocab)
    return out[0, 0]


def _reference(x_hat, vocab):
    # pure-JAX reference mirroring the torch code (including the aliasing of x and x_hat)
    xn = x_hat / jnp.linalg.norm(x_hat, axis=1, keepdims=True)
    vn = vocab / jnp.linalg.norm(vocab, axis=1, keepdims=True)
    sim = 1.0 - jnp.sum(xn @ vn.T, axis=1)
    s = jnp.sort(sim)
    pos = s[-3:]
    neg = s[:3]
    att = jnp.sum(jax.nn.relu(MARGIN + neg[:, None] - pos[None, :]))
    pres = REG_CONSTANT * jnp.sum(jnp.linalg.norm(xn - xn, axis=1))
    return att + pres


if __name__ == "__main__":
    key = jax.random.PRNGKey(0)
    k1, k2 = jax.random.split(key)
    N, V, D = 8, 20, 32                        # N embeddings, V vocab entries, hidden D
    x_hat = jax.random.normal(k1, (N, D), dtype=jnp.float32)
    vocab = jax.random.normal(k2, (V, D), dtype=jnp.float32)

    # tile_v=8 exercises the grid reduction (3 tiles) and the partial-last-tile mask.
    out = attract_preserve(x_hat, vocab, tile_v=8)
    out = jax.block_until_ready(out)

    ref = _reference(x_hat, vocab)
    assert jnp.allclose(out, ref, rtol=1e-4, atol=1e-4), (out, ref)

    # Also check the single-tile (tv == V) path.
    out2 = jax.block_until_ready(attract_preserve(x_hat, vocab))
    assert jnp.allclose(out2, ref, rtol=1e-4, atol=1e-4), (out2, ref)

    print("KERNEL_OK")
</pallas_src>

<mosaic_0001>
module attributes {stable_mosaic.version = 11 : i64} {
  func.func @_attract_preserve_kernel(%arg0: i32, %arg1: memref<8x32xf32, #tpu.memory_space<vmem>>, %arg2: memref<8x32xf32, #tpu.memory_space<vmem>>, %arg3: memref<1x1xf32, #tpu.memory_space<vmem>>, %arg4: memref<1x32xf32, #tpu.memory_space<vmem>>) attributes {dimension_semantics = [#tpu.dimension_semantics<arbitrary>], iteration_bounds = array<i64: 3>, scalar_prefetch = 0 : i64, scratch_operands = 1 : i64, tpu.core_type = #tpu.core_type<tc>, window_params = [{pipeline_mode = #tpu.pipeline_mode<synchronous>, transform_indices = @transform_0, window_bounds = array<i64: 8, 32>}, {transform_indices = @transform_1, window_bounds = array<i64: 8, 32>}, {pipeline_mode = #tpu.pipeline_mode<synchronous>, transform_indices = @transform_2, window_bounds = array<i64: 1, 1>}]} {
    %c0_i32 = arith.constant 0 : i32
    %0 = arith.cmpi eq, %arg0, %c0_i32 : i32
    %1 = arith.extui %0 : i1 to i32
    %c0_i32_0 = arith.constant 0 : i32
    %2 = arith.cmpi ne, %1, %c0_i32_0 : i32
    scf.if %2 {
      %cst_9 = arith.constant 0.000000e+00 : f32
      %28 = vector.broadcast %cst_9 : f32 to vector<1x32xf32>
      %c0_10 = arith.constant 0 : index
      %c0_11 = arith.constant 0 : index
      %29 = vector.load %arg4[%c0_10, %c0_11] : memref<1x32xf32, #tpu.memory_space<vmem>>, vector<1x32xf32>
      tpu.vector_store %arg4[%c0_10, %c0_11], %28 {strides = array<i32>} : memref<1x32xf32, #tpu.memory_space<vmem>>, vector<1x32xf32>,
    } else {
    }
    %c0 = arith.constant 0 : index
    %c0_1 = arith.constant 0 : index
    %3 = vector.load %arg2[%c0, %c0_1] : memref<8x32xf32, #tpu.memory_space<vmem>>, vector<8x32xf32>
    %4 = arith.mulf %3, %3 : vector<8x32xf32>
    %cst = arith.constant dense<0.000000e+00> : vector<8xf32>
    %5 = vector.multi_reduction <add>, %4, %cst [1] : vector<8x32xf32> to vector<8xf32>
    %6 = vector.shape_cast %5 : vector<8xf32> to vector<8x1xf32>
    %7 = math.rsqrt %6 : vector<8x1xf32>
    %8 = vector.broadcast %7 : vector<8x1xf32> to vector<8x32xf32>
    %9 = arith.mulf %3, %8 : vector<8x32xf32>
    %c8_i32 = arith.constant 8 : i32
    %10 = arith.muli %arg0, %c8_i32 : i32
    %11 = tpu.iota {dimensions = array<i32: 0>} : vector<8x1xi32>
    %12 = vector.broadcast %10 : i32 to vector<8x1xi32>
    %13 = arith.addi %12, %11 : vector<8x1xi32>
    %c20_i32 = arith.constant 20 : i32
    %14 = vector.broadcast %c20_i32 : i32 to vector<8x1xi32>
    %15 = arith.cmpi slt, %13, %14 : vector<8x1xi32>
    %cst_2 = arith.constant 0.000000e+00 : f32
    %16 = vector.shape_cast %15 : vector<8x1xi1> to vector<8x1xi1>
    %17 = vector.broadcast %16 : vector<8x1xi1> to vector<8x32xi1>
    %18 = vector.broadcast %cst_2 : f32 to vector<8x32xf32>
    %19 = arith.select %17, %9, %18 : vector<8x32xi1>, vector<8x32xf32>
    %c0_3 = arith.constant 0 : index
    %c0_4 = arith.constant 0 : index
    %20 = vector.load %arg4[%c0_3, %c0_4] : memref<1x32xf32, #tpu.memory_space<vmem>>, vector<1x32xf32>
    %cst_5 = arith.constant dense<0.000000e+00> : vector<32xf32>
    %21 = vector.multi_reduction <add>, %19, %cst_5 [0] : vector<8x32xf32> to vector<32xf32>
    %22 = vector.shape_cast %21 : vector<32xf32> to vector<1x32xf32>
    %23 = arith.addf %20, %22 : vector<1x32xf32>
    %c0_6 = arith.constant 0 : index
    %c0_7 = arith.constant 0 : index
    %24 = vector.load %arg4[%c0_6, %c0_7] : memref<1x32xf32, #tpu.memory_space<vmem>>, vector<1x32xf32>
    tpu.vector_store %arg4[%c0_6, %c0_7], %23 {strides = array<i32>} : memref<1x32xf32, #tpu.memory_space<vmem>>, vector<1x32xf32>,
    %c2_i32 = arith.constant 2 : i32
    %25 = arith.cmpi eq, %arg0, %c2_i32 : i32
    %26 = arith.extui %25 : i1 to i32
    %c0_i32_8 = arith.constant 0 : i32
    %27 = arith.cmpi ne, %26, %c0_i32_8 : i32
    scf.if %27 {
      %c0_9 = arith.constant 0 : index
      %c0_10 = arith.constant 0 : index
      %28 = vector.load %arg1[%c0_9, %c0_10] : memref<8x32xf32, #tpu.memory_space<vmem>>, vector<8x32xf32>
      %29 = arith.mulf %28, %28 : vector<8x32xf32>
      %cst_11 = arith.constant dense<0.000000e+00> : vector<8xf32>
      %30 = vector.multi_reduction <add>, %29, %cst_11 [1] : vector<8x32xf32> to vector<8xf32>
      %31 = vector.shape_cast %30 : vector<8xf32> to vector<8x1xf32>
      %32 = math.rsqrt %31 : vector<8x1xf32>
      %33 = vector.broadcast %32 : vector<8x1xf32> to vector<8x32xf32>
      %34 = arith.mulf %28, %33 : vector<8x32xf32>
      %c0_12 = arith.constant 0 : index
      %c0_13 = arith.constant 0 : index
      %35 = vector.load %arg4[%c0_12, %c0_13] : memref<1x32xf32, #tpu.memory_space<vmem>>, vector<1x32xf32>
      %cst_14 = arith.constant dense<0.000000e+00> : vector<1x8xf32>
      %36 = tpu.matmul %35, %34, %cst_14 {dimension_numbers = #tpu.dot_dimension_numbers<[1], [1], [0], [0], [0, 0, 1, 0], [], []>} : vector<1x32xf32>, vector<8x32xf32>, vector<1x8xf32> -> vector<1x8xf32>
      %cst_15 = arith.constant 1.000000e+00 : f32
      %37 = vector.broadcast %cst_15 : f32 to vector<1x8xf32>
      %38 = arith.subf %37, %36 : vector<1x8xf32>
      %39 = tpu.iota {dimensions = array<i32: 1>} : vector<1x8xi32>
      %true = arith.constant true
      %40 = vector.broadcast %true : i1 to vector<1x8xi1>
      %cst_16 = arith.constant 0x7F800000 : f32
      %41 = vector.broadcast %cst_16 : f32 to vector<1x8xf32>
      %42 = arith.select %40, %38, %41 : vector<1x8xi1>, vector<1x8xf32>
      %43 = vector.shape_cast %42 : vector<1x8xf32> to vector<1x1x8xf32>
      %cst_17 = arith.constant dense<0x7F800000> : vector<1xf32>
      %44 = vector.multi_reduction <minimumf>, %43, %cst_17 [1, 2] : vector<1x1x8xf32> to vector<1xf32>
      %45 = vector.shape_cast %44 : vector<1xf32> to vector<1x1x1xf32>
      %46 = vector.extract %45[0, 0, 0] : f32 from vector<1x1x1xf32>
      %47 = vector.broadcast %46 : f32 to vector<1x1xf32>
      %48 = vector.broadcast %47 : vector<1x1xf32> to vector<1x8xf32>
      %49 = arith.cmpf oeq, %42, %48 : vector<1x8xf32>
      %c8_i32_18 = arith.constant 8 : i32
      %50 = vector.broadcast %c8_i32_18 : i32 to vector<1x8xi32>
      %51 = arith.select %49, %39, %50 : vector<1x8xi1>, vector<1x8xi32>
      %52 = vector.shape_cast %51 : vector<1x8xi32> to vector<1x1x8xi32>
      %cst_19 = arith.constant dense<2147483647> : vector<1xi32>
      %53 = vector.multi_reduction <minsi>, %52, %cst_19 [1, 2] : vector<1x1x8xi32> to vector<1xi32>
      %54 = vector.shape_cast %53 : vector<1xi32> to vector<1x1x1xi32>
      %55 = vector.extract %54[0, 0, 0] : i32 from vector<1x1x1xi32>
      %56 = vector.broadcast %55 : i32 to vector<1x1xi32>
      %57 = vector.broadcast %56 : vector<1x1xi32> to vector<1x8xi32>
      %58 = arith.cmpi ne, %39, %57 : vector<1x8xi32>
      %59 = arith.andi %40, %58 : vector<1x8xi1>
      %cst_20 = arith.constant 0x7F800000 : f32
      %60 = vector.broadcast %cst_20 : f32 to vector<1x8xf32>
      %61 = arith.select %59, %38, %60 : vector<1x8xi1>, vector<1x8xf32>
      %62 = vector.shape_cast %61 : vector<1x8xf32> to vector<1x1x8xf32>
      %cst_21 = arith.constant dense<0x7F800000> : vector<1xf32>
      %63 = vector.multi_reduction <minimumf>, %62, %cst_21 [1, 2] : vector<1x1x8xf32> to vector<1xf32>
      %64 = vector.shape_cast %63 : vector<1xf32> to vector<1x1x1xf32>
      %65 = vector.extract %64[0, 0, 0] : f32 from vector<1x1x1xf32>
      %66 = vector.broadcast %65 : f32 to vector<1x1xf32>
      %67 = vector.broadcast %66 : vector<1x1xf32> to vector<1x8xf32>
      %68 = arith.cmpf oeq, %61, %67 : vector<1x8xf32>
      %c8_i32_22 = arith.constant 8 : i32
      %69 = vector.broadcast %c8_i32_22 : i32 to vector<1x8xi32>
      %70 = arith.select %68, %39, %69 : vector<1x8xi1>, vector<1x8xi32>
      %71 = vector.shape_cast %70 : vector<1x8xi32> to vector<1x1x8xi32>
      %cst_23 = arith.constant dense<2147483647> : vector<1xi32>
      %72 = vector.multi_reduction <minsi>, %71, %cst_23 [1, 2] : vector<1x1x8xi32> to vector<1xi32>
      %73 = vector.shape_cast %72 : vector<1xi32> to vector<1x1x1xi32>
      %74 = vector.extract %73[0, 0, 0] : i32 from vector<1x1x1xi32>
      %75 = vector.broadcast %74 : i32 to vector<1x1xi32>
      %76 = vector.broadcast %75 : vector<1x1xi32> to vector<1x8xi32>
      %77 = arith.cmpi ne, %39, %76 : vector<1x8xi32>
      %78 = arith.andi %59, %77 : vector<1x8xi1>
      %cst_24 = arith.constant 0x7F800000 : f32
      %79 = vector.broadcast %cst_24 : f32 to vector<1x8xf32>
      %80 = arith.select %78, %38, %79 : vector<1x8xi1>, vector<1x8xf32>
      %81 = vector.shape_cast %80 : vector<1x8xf32> to vector<1x1x8xf32>
      %cst_25 = arith.constant dense<0x7F800000> : vector<1xf32>
      %82 = vector.multi_reduction <minimumf>, %81, %cst_25 [1, 2] : vector<1x1x8xf32> to vector<1xf32>
      %83 = vector.shape_cast %82 : vector<1xf32> to vector<1x1x1xf32>
      %84 = vector.extract %83[0, 0, 0] : f32 from vector<1x1x1xf32>
      %85 = vector.broadcast %84 : f32 to vector<1x1xf32>
      %true_26 = arith.constant true
      %86 = vector.broadcast %true_26 : i1 to vector<1x8xi1>
      %cst_27 = arith.constant 0xFF800000 : f32
      %87 = vector.broadcast %cst_27 : f32 to vector<1x8xf32>
      %88 = arith.select %86, %38, %87 : vector<1x8xi1>, vector<1x8xf32>
      %89 = vector.shape_cast %88 : vector<1x8xf32> to vector<1x1x8xf32>
      %cst_28 = arith.constant dense<0xFF800000> : vector<1xf32>
      %90 = vector.multi_reduction <maximumf>, %89, %cst_28 [1, 2] : vector<1x1x8xf32> to vector<1xf32>
      %91 = vector.shape_cast %90 : vector<1xf32> to vector<1x1x1xf32>
      %92 = vector.extract %91[0, 0, 0] : f32 from vector<1x1x1xf32>
      %93 = vector.broadcast %92 : f32 to vector<1x1xf32>
      %94 = vector.broadcast %93 : vector<1x1xf32> to vector<1x8xf32>
      %95 = arith.cmpf oeq, %88, %94 : vector<1x8xf32>
      %c8_i32_29 = arith.constant 8 : i32
      %96 = vector.broadcast %c8_i32_29 : i32 to vector<1x8xi32>
      %97 = arith.select %95, %39, %96 : vector<1x8xi1>, vector<1x8xi32>
      %98 = vector.shape_cast %97 : vector<1x8xi32> to vector<1x1x8xi32>
      %cst_30 = arith.constant dense<2147483647> : vector<1xi32>
      %99 = vector.multi_reduction <minsi>, %98, %cst_30 [1, 2] : vector<1x1x8xi32> to vector<1xi32>
      %100 = vector.shape_cast %99 : vector<1xi32> to vector<1x1x1xi32>
      %101 = vector.extract %100[0, 0, 0] : i32 from vector<1x1x1xi32>
      %102 = vector.broadcast %101 : i32 to vector<1x1xi32>
      %103 = vector.broadcast %102 : vector<1x1xi32> to vector<1x8xi32>
      %104 = arith.cmpi ne, %39, %103 : vector<1x8xi32>
      %105 = arith.andi %86, %104 : vector<1x8xi1>
      %cst_31 = arith.constant 0xFF800000 : f32
      %106 = vector.broadcast %cst_31 : f32 to vector<1x8xf32>
      %107 = arith.select %105, %38, %106 : vector<1x8xi1>, vector<1x8xf32>
      %108 = vector.shape_cast %107 : vector<1x8xf32> to vector<1x1x8xf32>
      %cst_32 = arith.constant dense<0xFF800000> : vector<1xf32>
      %109 = vector.multi_reduction <maximumf>, %108, %cst_32 [1, 2] : vector<1x1x8xf32> to vector<1xf32>
      %110 = vector.shape_cast %109 : vector<1xf32> to vector<1x1x1xf32>
      %111 = vector.extract %110[0, 0, 0] : f32 from vector<1x1x1xf32>
      %112 = vector.broadcast %111 : f32 to vector<1x1xf32>
      %113 = vector.broadcast %112 : vector<1x1xf32> to vector<1x8xf32>
      %114 = arith.cmpf oeq, %107, %113 : vector<1x8xf32>
      %c8_i32_33 = arith.constant 8 : i32
      %115 = vector.broadcast %c8_i32_33 : i32 to vector<1x8xi32>
      %116 = arith.select %114, %39, %115 : vector<1x8xi1>, vector<1x8xi32>
      %117 = vector.shape_cast %116 : vector<1x8xi32> to vector<1x1x8xi32>
      %cst_34 = arith.constant dense<2147483647> : vector<1xi32>
      %118 = vector.multi_reduction <minsi>, %117, %cst_34 [1, 2] : vector<1x1x8xi32> to vector<1xi32>
      %119 = vector.shape_cast %118 : vector<1xi32> to vector<1x1x1xi32>
      %120 = vector.extract %119[0, 0, 0] : i32 from vector<1x1x1xi32>
      %121 = vector.broadcast %120 : i32 to vector<1x1xi32>
      %122 = vector.broadcast %121 : vector<1x1xi32> to vector<1x8xi32>
      %123 = arith.cmpi ne, %39, %122 : vector<1x8xi32>
      %124 = arith.andi %105, %123 : vector<1x8xi1>
      %cst_35 = arith.constant 0xFF800000 : f32
      %125 = vector.broadcast %cst_35 : f32 to vector<1x8xf32>
      %126 = arith.select %124, %38, %125 : vector<1x8xi1>, vector<1x8xf32>
      %127 = vector.shape_cast %126 : vector<1x8xf32> to vector<1x1x8xf32>
      %cst_36 = arith.constant dense<0xFF800000> : vector<1xf32>
      %128 = vector.multi_reduction <maximumf>, %127, %cst_36 [1, 2] : vector<1x1x8xf32> to vector<1xf32>
      %129 = vector.shape_cast %128 : vector<1xf32> to vector<1x1x1xf32>
      %130 = vector.extract %129[0, 0, 0] : f32 from vector<1x1x1xf32>
      %131 = vector.broadcast %130 : f32 to vector<1x1xf32>
      %cst_37 = arith.constant 0.000000e+00 : f32
      %132 = vector.broadcast %cst_37 : f32 to vector<1x1xf32>
      %cst_38 = arith.constant 6.000000e-01 : f32
      %133 = vector.broadcast %cst_38 : f32 to vector<1x1xf32>
      %134 = arith.addf %133, %47 : vector<1x1xf32>
      %135 = arith.subf %134, %93 : vector<1x1xf32>
      %cst_39 = arith.constant 0.000000e+00 : f32
      %136 = vector.broadcast %cst_39 : f32 to vector<1x1xf32>
      %137 = arith.maximumf %135, %136 : vector<1x1xf32>
      %138 = arith.addf %132, %137 : vector<1x1xf32>
      %cst_40 = arith.constant 6.000000e-01 : f32
      %139 = vector.broadcast %cst_40 : f32 to vector<1x1xf32>
      %140 = arith.addf %139, %47 : vector<1x1xf32>
      %141 = arith.subf %140, %112 : vector<1x1xf32>
      %cst_41 = arith.constant 0.000000e+00 : f32
      %142 = vector.broadcast %cst_41 : f32 to vector<1x1xf32>
      %143 = arith.maximumf %141, %142 : vector<1x1xf32>
      %144 = arith.addf %138, %143 : vector<1x1xf32>
      %cst_42 = arith.constant 6.000000e-01 : f32
      %145 = vector.broadcast %cst_42 : f32 to vector<1x1xf32>
      %146 = arith.addf %145, %47 : vector<1x1xf32>
      %147 = arith.subf %146, %131 : vector<1x1xf32>
      %cst_43 = arith.constant 0.000000e+00 : f32
      %148 = vector.broadcast %cst_43 : f32 to vector<1x1xf32>
      %149 = arith.maximumf %147, %148 : vector<1x1xf32>
      %150 = arith.addf %144, %149 : vector<1x1xf32>
      %cst_44 = arith.constant 6.000000e-01 : f32
      %151 = vector.broadcast %cst_44 : f32 to vector<1x1xf32>
      %152 = arith.addf %151, %66 : vector<1x1xf32>
      %153 = arith.subf %152, %93 : vector<1x1xf32>
      %cst_45 = arith.constant 0.000000e+00 : f32
      %154 = vector.broadcast %cst_45 : f32 to vector<1x1xf32>
      %155 = arith.maximumf %153, %154 : vector<1x1xf32>
      %156 = arith.addf %150, %155 : vector<1x1xf32>
      %cst_46 = arith.constant 6.000000e-01 : f32
      %157 = vector.broadcast %cst_46 : f32 to vector<1x1xf32>
      %158 = arith.addf %157, %66 : vector<1x1xf32>
      %159 = arith.subf %158, %112 : vector<1x1xf32>
      %cst_47 = arith.constant 0.000000e+00 : f32
      %160 = vector.broadcast %cst_47 : f32 to vector<1x1xf32>
      %161 = arith.maximumf %159, %160 : vector<1x1xf32>
      %162 = arith.addf %156, %161 : vector<1x1xf32>
      %cst_48 = arith.constant 6.000000e-01 : f32
      %163 = vector.broadcast %cst_48 : f32 to vector<1x1xf32>
      %164 = arith.addf %163, %66 : vector<1x1xf32>
      %165 = arith.subf %164, %131 : vector<1x1xf32>
      %cst_49 = arith.constant 0.000000e+00 : f32
      %166 = vector.broadcast %cst_49 : f32 to vector<1x1xf32>
      %167 = arith.maximumf %165, %166 : vector<1x1xf32>
      %168 = arith.addf %162, %167 : vector<1x1xf32>
      %cst_50 = arith.constant 6.000000e-01 : f32
      %169 = vector.broadcast %cst_50 : f32 to vector<1x1xf32>
      %170 = arith.addf %169, %85 : vector<1x1xf32>
      %171 = arith.subf %170, %93 : vector<1x1xf32>
      %cst_51 = arith.constant 0.000000e+00 : f32
      %172 = vector.broadcast %cst_51 : f32 to vector<1x1xf32>
      %173 = arith.maximumf %171, %172 : vector<1x1xf32>
      %174 = arith.addf %168, %173 : vector<1x1xf32>
      %cst_52 = arith.constant 6.000000e-01 : f32
      %175 = vector.broadcast %cst_52 : f32 to vector<1x1xf32>
      %176 = arith.addf %175, %85 : vector<1x1xf32>
      %177 = arith.subf %176, %112 : vector<1x1xf32>
      %cst_53 = arith.constant 0.000000e+00 : f32
      %178 = vector.broadcast %cst_53 : f32 to vector<1x1xf32>
      %179 = arith.maximumf %177, %178 : vector<1x1xf32>
      %180 = arith.addf %174, %179 : vector<1x1xf32>
      %cst_54 = arith.constant 6.000000e-01 : f32
      %181 = vector.broadcast %cst_54 : f32 to vector<1x1xf32>
      %182 = arith.addf %181, %85 : vector<1x1xf32>
      %183 = arith.subf %182, %131 : vector<1x1xf32>
      %cst_55 = arith.constant 0.000000e+00 : f32
      %184 = vector.broadcast %cst_55 : f32 to vector<1x1xf32>
      %185 = arith.maximumf %183, %184 : vector<1x1xf32>
      %186 = arith.addf %180, %185 : vector<1x1xf32>
      %c0_56 = arith.constant 0 : index
      %c0_57 = arith.constant 0 : index
      %187 = vector.load %arg3[%c0_56, %c0_57] : memref<1x1xf32, #tpu.memory_space<vmem>>, vector<1x1xf32>
      tpu.vector_store %arg3[%c0_56, %c0_57], %186 {strides = array<i32>} : memref<1x1xf32, #tpu.memory_space<vmem>>, vector<1x1xf32>,
    } else {
    }
    return
  }
  func.func @transform_0(%arg0: i32) -> (i32, i32) {
    %c0_i32 = arith.constant 0 : i32
    %c0_i32_0 = arith.constant 0 : i32
    %c0_i32_1 = arith.constant 0 : i32
    return %c0_i32, %c0_i32_0 : i32, i32
  }
  func.func @transform_1(%arg0: i32) -> (i32, i32) {
    %c0_i32 = arith.constant 0 : i32
    %c0_i32_0 = arith.constant 0 : i32
    return %arg0, %c0_i32 : i32, i32
  }
  func.func @transform_2(%arg0: i32) -> (i32, i32) {
    %c0_i32 = arith.constant 0 : i32
    %c0_i32_0 = arith.constant 0 : i32
    %c0_i32_1 = arith.constant 0 : i32
    return %c0_i32, %c0_i32_0 : i32, i32
  }
}

</mosaic_0001>

<llo_original>
// kernel: tpu_custom_call.1
$region0: #{tpu_custom_call.1}
  #allocation0 [shape = 'u32[]', space=smem, size = 0x4, offset = 0x4, fixed_abs, tag = 'smem constant byte address 0x4 - core index']
  #allocation1 [shape = 'u32[144,128]{1,0:T(1,128)}', space=vmem, size = 0x12000, scoped, tag = 'internal scratch']
  #allocation2 [shape = 'f32[1,32]{1,0:T(1,128)}', space=vmem, size = 0x200, scoped, tag = 'scratch operand']
  %s0 = inlined_call_operand.hbm [shape: f32[8,32], index: 0, kind: input, shape index: {}]
  %s1 = inlined_call_operand.hbm [shape: f32[20,32], index: 1, kind: input, shape index: {}]
  %s2 = inlined_call_operand.hbm [shape: f32[1,1], index: 2, kind: output, shape index: {}]
  %s3 = sld [smem:[#allocation0]]
  $region57: #{tpu_custom_call.1} parent=0
    _
  %s5 = ssub.s32 1, %s3
  %s6 = scalar_select 0, %s5, %s3
  $region1: #{tpu_custom_call.1} parent=0
    #allocation3 [shape = 'u8[4096]{0}', space=vmem, size = 0x1000, scoped, tag = 'input window, operand 0, single buffered']
    #allocation4 [shape = 's32[2]{0}', space=sflag, size = 0x8, scoped, tag = 'scoped memory for tpu_custom_call.1']
    #allocation5 [shape = 's32[2]{0}', space=sflag, size = 0x8, scoped, tag = 'scoped memory for tpu_custom_call.1']
    #allocation6 [shape = 'u8[8192]{0}', space=vmem, size = 0x2000, scoped, tag = 'input window, operand 1']
    #allocation7 [shape = 's32[2]{0}', space=sflag, size = 0x8, scoped, tag = 'scoped memory for tpu_custom_call.1']
    #allocation8 [shape = 'u8[512]{0}', space=vmem, size = 0x400, scoped, tag = 'output window, operand 0, single buffered']
    %7 = vsyncpa [#allocation4], 0
    %8 = vsyncpa [#allocation7], 0
    %s9 = scalar_lea.sflag [#allocation7], 1
    %10 = vsyncpa %s9, 0
    %11 = vsyncpa [#allocation5], 0
    loop: start=0, step=1, limit=5
    $region2: #{tpu_custom_call.1} parent=1 // loop_pre_header
      _
    $region3: #{tpu_custom_call.1} parent=1 // loop_header
      %s13 = sphi 0, %s17
      %p14 = scmp.ge.s32.totalorder %s13, 5
      %s21 = sphi 0, %s21
      %s23 = sphi 0, %s21
      %s24 = sphi 0, %s23
      %s38 = sphi 0, %s24
      %s44 = sphi 0, %s46
      %s47 = sphi 0, %s44
      %s48 = sphi 0, %s47
      %s64 = sphi 0, %s48
      %s68 = sphi 0, %s68
      %s70 = sphi 0, %s68
      %s71 = sphi 0, %s70
      %s85 = sphi 0, %s71
    $region4: #{tpu_custom_call.1} parent=1 // loop_header_branch
      %16 = sbr.rel (%p14) target = $region8
    $region5: #{tpu_custom_call.1} parent=1 // loop_body
      %s18 = ssub.s32 %s13, 1
      %s19 = ssub.s32 %s13, 2
      %s20 = sadd.s32 %s13, 1
      %s22 = sadd.s32 %s21, 1
      %p25 = scmp.eq.s32.totalorder %s13, 2
      %p26 = scmp.ne.s32.totalorder %s21, %s23
      %p27 = scmp.eq.s32.totalorder %s13, 0
      %p28 = por %p26, %p27
      %p29 = scmp.ne.s32.totalorder %s21, %s23
      %p30 = scmp.eq.s32.totalorder %s18, 2
      %p31 = por %p29, %p30
      %p32 = scmp.ne.s32.totalorder %s23, %s24
      %p33 = scmp.eq.s32.totalorder %s18, 0
      %p34 = por %p32, %p33
      %p35 = scmp.ne.s32.totalorder %s23, %s24
      %p36 = scmp.eq.s32.totalorder %s19, 2
      %p37 = por %p35, %p36
      %p39 = scmp.ne.s32.totalorder %s24, %s38
      %p40 = scmp.eq.s32.totalorder %s19, 0
      %p41 = por %p39, %p40
      %s42 = ssub.s32 %s13, %s20
      %p43 = scmp.eq.s32.totalorder %s42, 0
      %s45 = sadd.s32 %s44, 1
      %s46 = scalar_select %p43, %s44, %s45
      %p49 = pneg %p43
      %p50 = scmp.eq.s32.totalorder %s13, 2
      %p51 = por %p49, %p50
      %p52 = scmp.ne.s32.totalorder %s44, %s47
      %p53 = scmp.eq.s32.totalorder %s13, 0
      %p54 = por %p52, %p53
      %p55 = scmp.ne.s32.totalorder %s44, %s47
      %p56 = scmp.eq.s32.totalorder %s18, 2
      %p57 = por %p55, %p56
      %p58 = scmp.ne.s32.totalorder %s47, %s48
      %p59 = scmp.eq.s32.totalorder %s18, 0
      %p60 = por %p58, %p59
      %p61 = scmp.ne.s32.totalorder %s47, %s48
      %p62 = scmp.eq.s32.totalorder %s19, 2
      %p63 = por %p61, %p62
      %p65 = scmp.ne.s32.totalorder %s48, %s64
      %p66 = scmp.eq.s32.totalorder %s19, 0
      %p67 = por %p65, %p66
      %s69 = sadd.s32 %s68, 1
      %p72 = scmp.eq.s32.totalorder %s13, 2
      %p73 = scmp.ne.s32.totalorder %s68, %s70
      %p74 = scmp.eq.s32.totalorder %s13, 0
      %p75 = por %p73, %p74
      %p76 = scmp.ne.s32.totalorder %s68, %s70
      %p77 = scmp.eq.s32.totalorder %s18, 2
      %p78 = por %p76, %p77
      %p79 = scmp.ne.s32.totalorder %s70, %s71
      %p80 = scmp.eq.s32.totalorder %s18, 0
      %p81 = por %p79, %p80
      %p82 = scmp.ne.s32.totalorder %s70, %s71
      %p83 = scmp.eq.s32.totalorder %s19, 2
      %p84 = por %p82, %p83
      %p86 = scmp.ne.s32.totalorder %s71, %s85
      %p87 = scmp.eq.s32.totalorder %s19, 0
      %p88 = por %p86, %p87
      %p89 = scmp.le.s32.totalorder 1, %s13
      %p90 = scmp.lt.s32.totalorder %s13, 4
      %p91 = pnand %p89, %p90
      %p92 = pneg %p91
      // Predicated region
      $region9: #{tpu_custom_call.1} parent=5 // pred_check
        _
      $region10: #{tpu_custom_call.1} parent=5 // pred_check_branch
        %94 = sbr.rel (%p91) target = $region12
      $region11: #{tpu_custom_call.1} parent=5 // pred_region
        %s95 = ssub.s32 %s13, 1
        // Predicated region
        $region13: #{tpu_custom_call.1} parent=11 // pred_check
          %p96 = pneg %p34
        $region14: #{tpu_custom_call.1} parent=11 // pred_check_branch
          %98 = sbr.rel (%p96) target = $region16
        $region15: #{tpu_custom_call.1} parent=11 // pred_region
          %s100 = ssub.s32 128, 128
          %101 = vsyncadd [#allocation4], %s100
          %s103 = sshll.u32 [#allocation3], 4
          %s104 = int_to_ptr.vmem [resolvable:$true] %s103
          %106 = dma.hbm_to_vmem [thread:$0]  %s0, 128, %s104, [#allocation4]
        $region16: #{tpu_custom_call.1} parent=11 // pred_fallthru
          _
      $region12: #{tpu_custom_call.1} parent=5 // pred_fallthru
        _
      %p107 = scmp.lt.s32.totalorder %s13, 3
      // Predicated region
      $region17: #{tpu_custom_call.1} parent=5 // pred_check
        %p108 = pneg %p107
      $region18: #{tpu_custom_call.1} parent=5 // pred_check_branch
        %110 = sbr.rel (%p108) target = $region20
      $region19: #{tpu_custom_call.1} parent=5 // pred_region
        // Predicated region
        $region21: #{tpu_custom_call.1} parent=19 // pred_check
          %p111 = pneg %p54
        $region22: #{tpu_custom_call.1} parent=19 // pred_check_branch
          %113 = sbr.rel (%p111) target = $region24
        $region23: #{tpu_custom_call.1} parent=19 // pred_region
          %s114 = sand.u32 %s44, 1
          %s115 = scalar_lea.sflag [#allocation7], %s114
          %s116 = sand.u32 %s44, 1
          %s117 = smul.addr %s116, 8
          %s118 = scalar_lea.vmem [#allocation6], %s117
          %s120 = ssub.s32 128, 128
          %121 = vsyncadd %s115, %s120
          %s122 = smul.addr %s13, 128
          %s123 = scalar_lea.hbm %s1, %s122
          %s125 = sshll.u32 %s118, 4
          %s126 = int_to_ptr.vmem [resolvable:$true] %s125
          %128 = dma.hbm_to_vmem [thread:$0]  %s123, 128, %s126, %s115
        $region24: #{tpu_custom_call.1} parent=19 // pred_fallthru
          _
      $region20: #{tpu_custom_call.1} parent=5 // pred_fallthru
        _
      %p129 = scmp.le.s32.totalorder 1, %s13
      %p130 = scmp.lt.s32.totalorder %s13, 4
      %p131 = pnand %p129, %p130
      %p132 = pneg %p131
      // Predicated region
      $region25: #{tpu_custom_call.1} parent=5 // pred_check
        _
      $region26: #{tpu_custom_call.1} parent=5 // pred_check_branch
        %134 = sbr.rel (%p131) target = $region28
      $region27: #{tpu_custom_call.1} parent=5 // pred_region
        %s135 = ssub.s32 %s13, 1
        // Predicated region
        $region29: #{tpu_custom_call.1} parent=27 // pred_check
          %p136 = pneg %p34
        $region30: #{tpu_custom_call.1} parent=27 // pred_check_branch
          %138 = sbr.rel (%p136) target = $region32
        $region31: #{tpu_custom_call.1} parent=27 // pred_region
          %139 = dma.done [#allocation4], 128
        $region32: #{tpu_custom_call.1} parent=27 // pred_fallthru
          _
        %s140 = sand.u32 %s47, 1
        %s141 = scalar_lea.sflag [#allocation7], %s140
        %s142 = sand.u32 %s47, 1
        %s143 = smul.addr %s142, 8
        %s144 = scalar_lea.vmem [#allocation6], %s143
        // Predicated region
        $region33: #{tpu_custom_call.1} parent=27 // pred_check
          %p145 = pneg %p60
        $region34: #{tpu_custom_call.1} parent=27 // pred_check_branch
          %147 = sbr.rel (%p145) target = $region36
        $region35: #{tpu_custom_call.1} parent=27 // pred_region
          %148 = dma.done %s141, 128
        $region36: #{tpu_custom_call.1} parent=27 // pred_fallthru
          _
        %p149 = pneg %p34
        %p150 = pneg %p31
        %s151 = sand.u32 %s47, 1
        %s152 = scalar_lea.sflag [#allocation7], %s151
        %s153 = sand.u32 %s47, 1
        %s154 = smul.addr %s153, 8
        %s155 = scalar_lea.vmem [#allocation6], %s154
        %p156 = pneg %p60
        %p157 = pneg %p57
        %p158 = pneg %p81
        %p159 = pneg %p78
        %p160 = scmp.eq.s32.totalorder %s18, 0
        // Predicated region
        $region37: #{tpu_custom_call.1} parent=27 // pred_check
          %p161 = pneg %p160
        $region38: #{tpu_custom_call.1} parent=27 // pred_check_branch
          %163 = sbr.rel (%p161) target = $region40
        $region39: #{tpu_custom_call.1} parent=27 // pred_region
          %vm164 = vcmask 253952
          %165 = vst.msk [vmem:[#allocation2] sm:$0x1] %vm164, 0.0
        $region40: #{tpu_custom_call.1} parent=27 // pred_fallthru
          _
        %v166 = vld [vmem:[%s144] sm:$0xff]
        %v167 = vmul.f32 %v166, %v166
        %vm168 = vcmask 261120
        %v169 = vsel %vm168, %v167, 0.0
        %170 = vadd.xlane.f32.xlu0 %v169
        %v171 = vpop.xlane.xlu0 %170
        %v172 = vrsqrt.pop %v171
        %v173 = vmul.f32 %v166, %v172
        %s174 = smul.u32 %s18, 8
        %v175 = vlaneseq
        %v176 = vshrl.u32 %v175, 7
        %v177 = vstv %s174
        %v178 = vadd.s32 %v177, %v176
        %vm179 = vcmp.lt.s32.totalorder %v178, 20
        %v180 = vsel %vm179, 1, 0
        %vm181 = vcmp.eq.s32.totalorder %v180, 1
        %v182 = vsel %vm181, %v173, 0.0
        %v183 = vld [vmem:[#allocation2] sm:$0x1]
        %v184 = vsel %vm168, %v182, 0.0
        %v185 = vrot.slane %v184, 4
        %v186 = vadd.f32 %v184, %v185
        %v187 = vrot.slane %v186, 2
        %v188 = vadd.f32 %v186, %v187
        %v189 = vrot.slane %v188, 1
        %v190 = vadd.f32 %v188, %v189
        %v191 = vadd.f32 %v183, %v190
        %vm192 = vcmask 253952
        %193 = vst.msk [vmem:[#allocation2] sm:$0x1] %vm192, %v191
        %p194 = scmp.eq.s32.totalorder %s18, 2
        // Predicated region
        $region41: #{tpu_custom_call.1} parent=27 // pred_check
          %p195 = pneg %p194
        $region42: #{tpu_custom_call.1} parent=27 // pred_check_branch
          %197 = sbr.rel (%p195) target = $region44
        $region43: #{tpu_custom_call.1} parent=27 // pred_region
          %v198 = vld [vmem:[#allocation3] sm:$0xff]
          %v199 = vmul.f32 %v198, %v198
          %v200 = vsel %vm168, %v199, 0.0
          %201 = vadd.xlane.f32.xlu0 %v200
          %v202 = vpop.xlane.xlu0 %201
          %v203 = vrsqrt.pop %v202
          %v204 = vmul.f32 %v198, %v203
          %v205 = vld [vmem:[#allocation2] sm:$0x1]
          %v207 = vsel %vm168, %v205, 0
          %v210 = vsel %vm168, %v204, 0
          %212 = vmatprep.subr.mxu0 0.0
          %213 = vmatpush1.xpose.msra.mxu0 0.0
          %214 = vmatprep.subr.mxu0 0.0
          %215 = vmatpush1.xpose.msra.mxu0 0.0
          %216 = vmatprep.subr.mxu0 0.0
          %217 = vmatpush1.xpose.msra.mxu0 0.0
          %218 = vmatprep.subr.mxu0 0.0
          %219 = vmatpush1.xpose.msra.mxu0 0.0
          %220 = vmatprep.subr.mxu0 0.0
          %221 = vmatpush1.xpose.msra.mxu0 0.0
          %222 = vmatprep.subr.mxu0 0.0
          %223 = vmatpush1.xpose.msra.mxu0 0.0
          %224 = vmatprep.subr.mxu0 0.0
          %225 = vmatpush1.xpose.msra.mxu0 0.0
          %226 = vmatprep.subr.mxu0 0.0
          %227 = vmatpush1.xpose.msra.mxu0 0.0
          %228 = vmatprep.subr.mxu0 0.0
          %229 = vmatpush1.xpose.msra.mxu0 0.0
          %230 = vmatprep.subr.mxu0 0.0
          %231 = vmatpush1.xpose.msra.mxu0 0.0
          %232 = vmatprep.subr.mxu0 0.0
          %233 = vmatpush1.xpose.msra.mxu0 0.0
          %234 = vmatprep.subr.mxu0 0.0
          %235 = vmatpush1.xpose.msra.mxu0 0.0
          %236 = vmatprep.subr.mxu0 0.0
          %237 = vmatpush1.xpose.msra.mxu0 0.0
          %238 = vmatprep.subr.mxu0 0.0
          %239 = vmatpush1.xpose.msra.mxu0 0.0
          %240 = vmatprep.subr.mxu0 0.0
          %241 = vmatpush1.xpose.msra.mxu0 0.0
          %242 = vmatprep.subr.mxu0 0.0
          %243 = vmatpush1.xpose.msra.mxu0 %v210
          %244 = vmatprep.subr.mxu0 0.0
          %245 = vmatpush2.xpose.msra.mxu0 0.0
          %246 = vmatprep.subr.mxu0 0.0
          %247 = vmatpush2.xpose.msra.mxu0 0.0
          %248 = vmatprep.subr.mxu0 0.0
          %249 = vmatpush2.xpose.msra.mxu0 0.0
          %250 = vmatprep.subr.mxu0 0.0
          %251 = vmatpush2.xpose.msra.mxu0 0.0
          %252 = vmatprep.subr.mxu0 0.0
          %253 = vmatpush2.xpose.msra.mxu0 0.0
          %254 = vmatprep.subr.mxu0 0.0
          %255 = vmatpush2.xpose.msra.mxu0 0.0
          %256 = vmatprep.subr.mxu0 0.0
          %257 = vmatpush2.xpose.msra.mxu0 0.0
          %258 = vmatprep.subr.mxu0 0.0
          %259 = vmatpush2.xpose.msra.mxu0 0.0
          %260 = vmatprep.subr.mxu0 0.0
          %261 = vmatpush2.xpose.msra.mxu0 0.0
          %262 = vmatprep.subr.mxu0 0.0
          %263 = vmatpush2.xpose.msra.mxu0 0.0
          %264 = vmatprep.subr.mxu0 0.0
          %265 = vmatpush2.xpose.msra.mxu0 0.0
          %266 = vmatprep.subr.mxu0 0.0
          %267 = vmatpush2.xpose.msra.mxu0 0.0
          %268 = vmatprep.subr.mxu0 0.0
          %269 = vmatpush2.xpose.msra.mxu0 0.0
          %270 = vmatprep.subr.mxu0 0.0
          %271 = vmatpush2.xpose.msra.mxu0 0.0
          %272 = vmatprep.subr.mxu0 0.0
          %273 = vmatpush2.xpose.msra.mxu0 0.0
          %274 = vmatprep.subr.mxu0 0.0
          %275 = vmatpush2.xpose.msra.mxu0 0.0
          %276 = vmatprep.mubr.f32.mxu0 0.0
          %277 = vmatmul.mubr.f32.gmra.mxu0 %v207
          %v278 = vpop.f32.mrf.mxu0
          %v279 = vadd.f32 0.0, %v278
          %v280 = vpop.f32.mrf.mxu0
          %281 = vdwg.mxu0
          %v282 = vsub.f32 1.0, %v279
          %v283 = vlaneseq
          %v284 = vand.u32 %v283, 127
          %vm285 = vcmask 57344
          %v286 = vsel %vm285, %v282, inf
          %287 = vmin.xlane.f32.xlu0 %v286
          %v288 = vpop.xlane.xlu0 %287
          %v289 = vrot.slane %v288, 4
          %v290 = vmin.f32 %v288, %v289
          %v291 = vrot.slane %v290, 2
          %v292 = vmin.f32 %v290, %v291
          %v293 = vrot.slane %v292, 1
          %v294 = vmin.f32 %v292, %v293
          %s295 = vtos %v294
          %v296 = vstv %s295
          %vm297 = vcmp.eq.f32.partialorder %v282, %v296
          %v298 = vsel %vm297, %v284, 8
          %v299 = vsel %vm285, %v298, 2147483647
          %v300 = vand.u32 %v299, 65535
          %v301 = vshra.s32 %v299, 16
          %v302 = vcvt.s32.f32 %v300
          %v303 = vcvt.s32.f32 %v301
          %304 = vmin.xlane.f32.xlu0 %v303
          %v305 = vpop.xlane.xlu0 %304
          %vm306 = vcmp.eq.f32.partialorder %v303, %v305
          %v307 = vsel %vm306, %v302, inf
          %308 = vmin.xlane.f32.xlu0 %v307
          %v309 = vpop.xlane.xlu0 %308
          %v310 = vcvt.f32.s32 %v309
          %v311 = vcvt.f32.s32 %v305
          %v312 = vshll.u32 %v311, 16
          %v313 = vadd.s32 %v312, %v310
          %v314 = vrot.slane %v313, 4
          %vm315 = vcmp.lt.s32.totalorder %v313, %v314
          %v316 = vsel %vm315, %v313, %v314
          %v317 = vrot.slane %v316, 2
          %vm318 = vcmp.lt.s32.totalorder %v316, %v317
          %v319 = vsel %vm318, %v316, %v317
          %v320 = vrot.slane %v319, 1
          %vm321 = vcmp.lt.s32.totalorder %v319, %v320
          %v322 = vsel %vm321, %v319, %v320
          %s323 = vtos %v322
          %v324 = vstv %s323
          %vm325 = vcmp.ne.s32.totalorder %v284, %v324
          %v326 = vsel %vm325, %v282, inf
          %v327 = vsel %vm285, %v326, inf
          %328 = vmin.xlane.f32.xlu0 %v327
          %v329 = vpop.xlane.xlu0 %328
          %v330 = vrot.slane %v329, 4
          %v331 = vmin.f32 %v329, %v330
          %v332 = vrot.slane %v331, 2
          %v333 = vmin.f32 %v331, %v332
          %v334 = vrot.slane %v333, 1
          %v335 = vmin.f32 %v333, %v334
          %s336 = vtos %v335
          %v337 = vstv %s336
          %vm338 = vcmp.eq.f32.partialorder %v326, %v337
          %v339 = vsel %vm338, %v284, 8
          %v340 = vsel %vm285, %v339, 2147483647
          %v341 = vand.u32 %v340, 65535
          %v342 = vshra.s32 %v340, 16
          %v343 = vcvt.s32.f32 %v341
          %v344 = vcvt.s32.f32 %v342
          %345 = vmin.xlane.f32.xlu0 %v344
          %v346 = vpop.xlane.xlu0 %345
          %vm347 = vcmp.eq.f32.partialorder %v344, %v346
          %v348 = vsel %vm347, %v343, inf
          %349 = vmin.xlane.f32.xlu0 %v348
          %v350 = vpop.xlane.xlu0 %349
          %v351 = vcvt.f32.s32 %v350
          %v352 = vcvt.f32.s32 %v346
          %v353 = vshll.u32 %v352, 16
          %v354 = vadd.s32 %v353, %v351
          %v355 = vrot.slane %v354, 4
          %vm356 = vcmp.lt.s32.totalorder %v354, %v355
          %v357 = vsel %vm356, %v354, %v355
          %v358 = vrot.slane %v357, 2
          %vm359 = vcmp.lt.s32.totalorder %v357, %v358
          %v360 = vsel %vm359, %v357, %v358
          %v361 = vrot.slane %v360, 1
          %vm362 = vcmp.lt.s32.totalorder %v360, %v361
          %v363 = vsel %vm362, %v360, %v361
          %s364 = vtos %v363
          %v365 = vstv %s364
          %vm366 = vcmp.ne.s32.totalorder %v284, %v365
          %vm367 = vmand %vm325, %vm366
          %v368 = vsel %vm367, %v282, inf
          %v369 = vsel %vm285, %v368, inf
          %370 = vmin.xlane.f32.xlu0 %v369
          %v371 = vpop.xlane.xlu0 %370
          %v372 = vrot.slane %v371, 4
          %v373 = vmin.f32 %v371, %v372
          %v374 = vrot.slane %v373, 2
          %v375 = vmin.f32 %v373, %v374
          %v376 = vrot.slane %v375, 1
          %v377 = vmin.f32 %v375, %v376
          %s378 = vtos %v377
          %v379 = vstv %s378
          %v380 = vsel %vm285, %v282, -inf
          %381 = vmax.xlane.f32.xlu0 %v380
          %v382 = vpop.xlane.xlu0 %381
          %v383 = vrot.slane %v382, 4
          %v384 = vmax.f32 %v382, %v383
          %v385 = vrot.slane %v384, 2
          %v386 = vmax.f32 %v384, %v385
          %v387 = vrot.slane %v386, 1
          %v388 = vmax.f32 %v386, %v387
          %s389 = vtos %v388
          %v390 = vstv %s389
          %vm391 = vcmp.eq.f32.partialorder %v282, %v390
          %v392 = vsel %vm391, %v284, 8
          %v393 = vsel %vm285, %v392, 2147483647
          %v394 = vand.u32 %v393, 65535
          %v395 = vshra.s32 %v393, 16
          %v396 = vcvt.s32.f32 %v394
          %v397 = vcvt.s32.f32 %v395
          %398 = vmin.xlane.f32.xlu0 %v397
          %v399 = vpop.xlane.xlu0 %398
          %vm400 = vcmp.eq.f32.partialorder %v397, %v399
          %v401 = vsel %vm400, %v396, inf
          %402 = vmin.xlane.f32.xlu0 %v401
          %v403 = vpop.xlane.xlu0 %402
          %v404 = vcvt.f32.s32 %v403
          %v405 = vcvt.f32.s32 %v399
          %v406 = vshll.u32 %v405, 16
          %v407 = vadd.s32 %v406, %v404
          %v408 = vrot.slane %v407, 4
          %vm409 = vcmp.lt.s32.totalorder %v407, %v408
          %v410 = vsel %vm409, %v407, %v408
          %v411 = vrot.slane %v410, 2
          %vm412 = vcmp.lt.s32.totalorder %v410, %v411
          %v413 = vsel %vm412, %v410, %v411
          %v414 = vrot.slane %v413, 1
          %vm415 = vcmp.lt.s32.totalorder %v413, %v414
          %v416 = vsel %vm415, %v413, %v414
          %s417 = vtos %v416
          %v418 = vstv %s417
          %vm419 = vcmp.ne.s32.totalorder %v284, %v418
          %v420 = vsel %vm419, %v282, -inf
          %v421 = vsel %vm285, %v420, -inf
          %422 = vmax.xlane.f32.xlu0 %v421
          %v423 = vpop.xlane.xlu0 %422
          %v424 = vrot.slane %v423, 4
          %v425 = vmax.f32 %v423, %v424
          %v426 = vrot.slane %v425, 2
          %v427 = vmax.f32 %v425, %v426
          %v428 = vrot.slane %v427, 1
          %v429 = vmax.f32 %v427, %v428
          %s430 = vtos %v429
          %v431 = vstv %s430
          %vm432 = vcmp.eq.f32.partialorder %v420, %v431
          %v433 = vsel %vm432, %v284, 8
          %v434 = vsel %vm285, %v433, 2147483647
          %v435 = vand.u32 %v434, 65535
          %v436 = vshra.s32 %v434, 16
          %v437 = vcvt.s32.f32 %v435
          %v438 = vcvt.s32.f32 %v436
          %439 = vmin.xlane.f32.xlu0 %v438
          %v440 = vpop.xlane.xlu0 %439
          %vm441 = vcmp.eq.f32.partialorder %v438, %v440
          %v442 = vsel %vm441, %v437, inf
          %443 = vmin.xlane.f32.xlu0 %v442
          %v444 = vpop.xlane.xlu0 %443
          %v445 = vcvt.f32.s32 %v444
          %v446 = vcvt.f32.s32 %v440
          %v447 = vshll.u32 %v446, 16
          %v448 = vadd.s32 %v447, %v445
          %v449 = vrot.slane %v448, 4
          %vm450 = vcmp.lt.s32.totalorder %v448, %v449
          %v451 = vsel %vm450, %v448, %v449
          %v452 = vrot.slane %v451, 2
          %vm453 = vcmp.lt.s32.totalorder %v451, %v452
          %v454 = vsel %vm453, %v451, %v452
          %v455 = vrot.slane %v454, 1
          %vm456 = vcmp.lt.s32.totalorder %v454, %v455
          %v457 = vsel %vm456, %v454, %v455
          %s458 = vtos %v457
          %v459 = vstv %s458
          %vm460 = vcmp.ne.s32.totalorder %v284, %v459
          %vm461 = vmand %vm419, %vm460
          %v462 = vsel %vm461, %v282, -inf
          %v463 = vsel %vm285, %v462, -inf
          %464 = vmax.xlane.f32.xlu0 %v463
          %v465 = vpop.xlane.xlu0 %464
          %v466 = vrot.slane %v465, 4
          %v467 = vmax.f32 %v465, %v466
          %v468 = vrot.slane %v467, 2
          %v469 = vmax.f32 %v467, %v468
          %v470 = vrot.slane %v469, 1
          %v471 = vmax.f32 %v469, %v470
          %s472 = vtos %v471
          %v473 = vstv %s472
          %v474 = vadd.f32 %v296, 0.6
          %v475 = vsub.f32 %v474, %v390
          %v476 = vmax.f32 %v475, 0.0
          %v477 = vadd.f32 %v476, 0.0
          %v478 = vsub.f32 %v474, %v431
          %v479 = vmax.f32 %v478, 0.0
          %v480 = vadd.f32 %v477, %v479
          %v481 = vsub.f32 %v474, %v473
          %v482 = vmax.f32 %v481, 0.0
          %v483 = vadd.f32 %v480, %v482
          %v484 = vadd.f32 %v337, 0.6
          %v485 = vsub.f32 %v484, %v390
          %v486 = vmax.f32 %v485, 0.0
          %v487 = vadd.f32 %v483, %v486
          %v488 = vsub.f32 %v484, %v431
          %v489 = vmax.f32 %v488, 0.0
          %v490 = vadd.f32 %v487, %v489
          %v491 = vsub.f32 %v484, %v473
          %v492 = vmax.f32 %v491, 0.0
          %v493 = vadd.f32 %v490, %v492
          %v494 = vadd.f32 %v379, 0.6
          %v495 = vsub.f32 %v494, %v390
          %v496 = vmax.f32 %v495, 0.0
          %v497 = vadd.f32 %v493, %v496
          %v498 = vsub.f32 %v494, %v431
          %v499 = vmax.f32 %v498, 0.0
          %v500 = vadd.f32 %v497, %v499
          %v501 = vsub.f32 %v494, %v473
          %v502 = vmax.f32 %v501, 0.0
          %v503 = vadd.f32 %v500, %v502
          %vm504 = vcmask 0
          %505 = vst.msk [vmem:[#allocation8] sm:$0x1] %vm504, %v503
        $region44: #{tpu_custom_call.1} parent=27 // pred_fallthru
          _
        // Predicated region
        $region45: #{tpu_custom_call.1} parent=27 // pred_check
          %p506 = pneg %p78
        $region46: #{tpu_custom_call.1} parent=27 // pred_check_branch
          %508 = sbr.rel (%p506) target = $region48
        $region47: #{tpu_custom_call.1} parent=27 // pred_region
          %s510 = ssub.s32 16, 16
          %511 = vsyncadd [#allocation5], %s510
          %s513 = sshll.u32 [#allocation8], 4
          %s514 = int_to_ptr.vmem [resolvable:$true] %s513
          %516 = dma.vmem_to_hbm [thread:$0]  %s514, 16, %s2, [#allocation5]
        $region48: #{tpu_custom_call.1} parent=27 // pred_fallthru
          _
        // Predicated region
        $region49: #{tpu_custom_call.1} parent=27 // pred_check
          %p517 = pneg %p78
        $region50: #{tpu_custom_call.1} parent=27 // pred_check_branch
          %519 = sbr.rel (%p517) target = $region52
        $region51: #{tpu_custom_call.1} parent=27 // pred_region
          %520 = dma.done [#allocation5], 16
        $region52: #{tpu_custom_call.1} parent=27 // pred_fallthru
          _
      $region28: #{tpu_custom_call.1} parent=5 // pred_fallthru
        _
      %p521 = scmp.le.s32.totalorder 2, %s13
      // Predicated region
      $region53: #{tpu_custom_call.1} parent=5 // pred_check
        %p522 = pneg %p521
      $region54: #{tpu_custom_call.1} parent=5 // pred_check_branch
        %524 = sbr.rel (%p522) target = $region56
      $region55: #{tpu_custom_call.1} parent=5 // pred_region
        %s525 = ssub.s32 %s13, 2
      $region56: #{tpu_custom_call.1} parent=5 // pred_fallthru
        _
    $region6: #{tpu_custom_call.1} parent=1 // loop_footer
      %s17 = sadd.s32 1, %s13
    $region7: #{tpu_custom_call.1} parent=1 // loop_footer_branch
      %12 = sbr.rel target = $region3
    $region8: #{tpu_custom_call.1} parent=1 // loop_exit
      _
    %526 = vsyncpa [#allocation4], 1
    %s527 = scalar_lea.sflag [#allocation4], 1
    %528 = vsyncpa %s527, 1
    %529 = vsyncpa [#allocation7], 1
    %s530 = scalar_lea.sflag [#allocation7], 1
    %531 = vsyncpa %s530, 1
    %532 = vsyncpa [#allocation5], 1
    %s533 = scalar_lea.sflag [#allocation5], 1
    %534 = vsyncpa %s533, 1

</llo_original>
